<compile_context>
chip_gen: v7x
topology: tpu7x:2x2x1
jax: 0.10.0
libtpu: 0.0.40
codegen_flags: <defaults>
</compile_context>

<pallas_src>
import math
import functools

import jax
import jax.numpy as jnp
from jax import lax
from jax.experimental import pallas as pl
from jax.experimental.pallas import tpu as pltpu


_LANE = 128      # vreg lane width (last dim)
_SUBLANE = 8     # vreg sublane count (second-to-last dim)


def _round_up(n, m):
    return ((n + m - 1) // m) * m


def _apply_activation(y, activation):
    if activation is None:
        return y
    if activation == "relu":
        return jnp.maximum(y, 0.0)
    if activation == "gelu":
        # exact (erf-based) GELU, matching torch.nn.GELU() default
        return 0.5 * y * (1.0 + lax.erf(y * (1.0 / math.sqrt(2.0))))
    if activation == "tanh":
        return jnp.tanh(y)
    # TODO(synk): arbitrary getattr(nn, activation) activations are not mapped here.
    raise ValueError(f"unsupported activation: {activation}")


def _fused_mlp_kernel(*refs, n_layers, activation):
    """One batch tile through the whole MLP. refs = (x, w0, b0, ..., wN-1, bN-1, out)."""
    x_ref, o_ref = refs[0], refs[-1]
    wb = refs[1:-1]
    h = x_ref[...]
    for li in range(n_layers):
        w = wb[2 * li][...]
        b = wb[2 * li + 1][...]          # (1, N) -> broadcasts over the batch tile
        h = jnp.dot(h.astype(w.dtype), w, preferred_element_type=jnp.float32) + b
        if li < n_layers - 1:
            h = _apply_activation(h, activation)
    o_ref[...] = h.astype(o_ref.dtype)


def fused_mlp(x, params, activation=None, *, block_m=128):
    """y = MLP(x) in a single pallas_call.

    x:      (M, K0)
    params: list of (w, b), w: (K_i, N_i), b: (1, N_i), with K_{i+1} == N_i.
    """
    m, k0 = x.shape
    n_layers = len(params)
    n_last = params[-1][0].shape[1]

    # Lane-pad every feature dim to a multiple of 128 (zero padding is exact and
    # keeps every MXU pass / vector store full-width).
    dims = [k0] + [w.shape[1] for (w, _) in params]
    pdims = [_round_up(d, _LANE) for d in dims]

    # Batch tile: multiple of 8 sublanes. For M > block_m we get a real grid that
    # software-pipelines the x DMA and can be split across TensorCores.
    if m <= block_m:
        tm = _round_up(max(m, _SUBLANE), _SUBLANE)
    else:
        tm = block_m
    mp = _round_up(m, tm)

    x_p = jnp.zeros((mp, pdims[0]), x.dtype).at[:m, :k0].set(x)

    padded_wb = []
    for li, (w, b) in enumerate(params):
        kp, npad = pdims[li], pdims[li + 1]
        w_p = jnp.zeros((kp, npad), w.dtype).at[: w.shape[0], : w.shape[1]].set(w)
        b_p = jnp.zeros((1, npad), b.dtype).at[:, : b.shape[1]].set(b)
        padded_wb.extend((w_p, b_p))

    in_specs = [pl.BlockSpec((tm, pdims[0]), lambda i: (i, 0))]
    for li in range(n_layers):
        kp, npad = pdims[li], pdims[li + 1]
        in_specs.append(pl.BlockSpec((kp, npad), lambda i: (0, 0)))
        in_specs.append(pl.BlockSpec((1, npad), lambda i: (0, 0)))
    out_specs = pl.BlockSpec((tm, pdims[-1]), lambda i: (i, 0))

    # VMEM budget: double-buffered x/out tiles + resident (double-buffered) weights
    # + live f32 intermediates. Cap at 64 MiB so it stays portable to v7x.
    itemsize = jnp.dtype(x.dtype).itemsize
    vmem_est = 2 * (tm * pdims[0] + tm * pdims[-1]) * itemsize
    vmem_est += sum(
        2 * (pdims[li] * pdims[li + 1] + pdims[li + 1]) * itemsize
        for li in range(n_layers)
    )
    vmem_est += sum(tm * pdims[li + 1] * 4 for li in range(n_layers))
    vmem_limit = int(min(max(2 * vmem_est, 32 * 1024 * 1024), 64 * 1024 * 1024))

    kernel = functools.partial(
        _fused_mlp_kernel, n_layers=n_layers, activation=activation
    )
    out_p = pl.pallas_call(
        kernel,
        out_shape=jax.ShapeDtypeStruct((mp, pdims[-1]), x.dtype),
        grid=(mp // tm,),
        in_specs=in_specs,
        out_specs=out_specs,
        compiler_params=pltpu.CompilerParams(
            dimension_semantics=("parallel",),
            vmem_limit_bytes=vmem_limit,
        ),
    )(x_p, *padded_wb)

    return out_p[:m, :n_last]


class MLPPallas:
    """Mirrors the PyTorch MLP: Linear+act for dims[:-1], then a final Linear."""

    def __init__(self, input_dim, dims, activation=None, key=None, dtype=jnp.float32):
        if key is None:
            key = jax.random.PRNGKey(0)
        self.activation = activation
        self.params = []
        in_dim = input_dim
        for dim in dims:
            key, wk, bk = jax.random.split(key, 3)
            # deterministic init (uniform, same fan_in bound as torch's default)
            bound = 1.0 / math.sqrt(in_dim)
            w = jax.random.uniform(wk, (in_dim, dim), dtype, -bound, bound)
            b = jax.random.uniform(bk, (1, dim), dtype, -bound, bound)
            self.params.append((w, b))
            in_dim = dim

    def __call__(self, x):
        return fused_mlp(x, self.params, activation=self.activation)


def _reference_forward(x, params, activation):
    n_layers = len(params)
    for li, (w, b) in enumerate(params):
        x = x @ w + b
        if li < n_layers - 1:
            if activation == "relu":
                x = jnp.maximum(x, 0.0)
            elif activation == "gelu":
                x = 0.5 * x * (1.0 + lax.erf(x / math.sqrt(2.0)))
            elif activation == "tanh":
                x = jnp.tanh(x)
    return x


if __name__ == "__main__":
    key = jax.random.PRNGKey(0)

    # --- test 1: small shapes consistent with the module spec ---
    batch, input_dim = 8, 32
    dims = (64, 32, 16)
    activation = "gelu"

    key, xkey, pkey = jax.random.split(key, 3)
    x = jax.random.normal(xkey, (batch, input_dim), jnp.float32)
    mlp = MLPPallas(input_dim, dims, activation=activation, key=pkey)

    out = jax.block_until_ready(mlp(x))
    ref = _reference_forward(x, mlp.params, activation)
    assert out.shape == (batch, dims[-1])
    assert jnp.allclose(out, ref, atol=1e-5, rtol=1e-5)

    # --- test 2: exercise the batch grid (>1 tile), odd feature dims, relu ---
    batch2, input_dim2 = 200, 40
    dims2 = (96, 24)
    key, xkey2, pkey2 = jax.random.split(key, 3)
    x2 = jax.random.normal(xkey2, (batch2, input_dim2), jnp.float32)
    mlp2 = MLPPallas(input_dim2, dims2, activation="relu", key=pkey2)

    out2 = jax.block_until_ready(mlp2(x2))
    ref2 = _reference_forward(x2, mlp2.params, "relu")
    assert out2.shape == (batch2, dims2[-1])
    assert jnp.allclose(out2, ref2, atol=1e-5, rtol=1e-5)

    print("KERNEL_OK")
</pallas_src>

<mosaic_0001>
module attributes {stable_mosaic.version = 11 : i64} {
  func.func @_fused_mlp_kernel(%arg0: i32, %arg1: memref<8x128xf32, #tpu.memory_space<vmem>>, %arg2: memref<128x128xf32, #tpu.memory_space<vmem>>, %arg3: memref<1x128xf32, #tpu.memory_space<vmem>>, %arg4: memref<128x128xf32, #tpu.memory_space<vmem>>, %arg5: memref<1x128xf32, #tpu.memory_space<vmem>>, %arg6: memref<128x128xf32, #tpu.memory_space<vmem>>, %arg7: memref<1x128xf32, #tpu.memory_space<vmem>>, %arg8: memref<8x128xf32, #tpu.memory_space<vmem>>) attributes {dimension_semantics = [#tpu.dimension_semantics<parallel>], iteration_bounds = array<i64: 1>, scalar_prefetch = 0 : i64, scratch_operands = 0 : i64, tpu.core_type = #tpu.core_type<tc>, window_params = [{transform_indices = @transform_0, window_bounds = array<i64: 8, 128>}, {pipeline_mode = #tpu.pipeline_mode<synchronous>, transform_indices = @transform_1, window_bounds = array<i64: 128, 128>}, {pipeline_mode = #tpu.pipeline_mode<synchronous>, transform_indices = @transform_2, window_bounds = array<i64: 1, 128>}, {pipeline_mode = #tpu.pipeline_mode<synchronous>, transform_indices = @transform_3, window_bounds = array<i64: 128, 128>}, {pipeline_mode = #tpu.pipeline_mode<synchronous>, transform_indices = @transform_4, window_bounds = array<i64: 1, 128>}, {pipeline_mode = #tpu.pipeline_mode<synchronous>, transform_indices = @transform_5, window_bounds = array<i64: 128, 128>}, {pipeline_mode = #tpu.pipeline_mode<synchronous>, transform_indices = @transform_6, window_bounds = array<i64: 1, 128>}, {transform_indices = @transform_7, window_bounds = array<i64: 8, 128>}]} {
    %c0 = arith.constant 0 : index
    %c0_0 = arith.constant 0 : index
    %0 = vector.load %arg1[%c0, %c0_0] : memref<8x128xf32, #tpu.memory_space<vmem>>, vector<8x128xf32>
    %c0_1 = arith.constant 0 : index
    %c0_2 = arith.constant 0 : index
    %1 = vector.load %arg2[%c0_1, %c0_2] : memref<128x128xf32, #tpu.memory_space<vmem>>, vector<128x128xf32>
    %c0_3 = arith.constant 0 : index
    %c0_4 = arith.constant 0 : index
    %2 = vector.load %arg3[%c0_3, %c0_4] : memref<1x128xf32, #tpu.memory_space<vmem>>, vector<1x128xf32>
    %cst = arith.constant dense<0.000000e+00> : vector<8x128xf32>
    %3 = tpu.matmul %0, %1, %cst {dimension_numbers = #tpu.dot_dimension_numbers<[1], [0], [0], [1], [0, 0, 1, 1], [], []>} : vector<8x128xf32>, vector<128x128xf32>, vector<8x128xf32> -> vector<8x128xf32>
    %4 = vector.broadcast %2 : vector<1x128xf32> to vector<8x128xf32>
    %5 = arith.addf %3, %4 : vector<8x128xf32>
    %cst_5 = arith.constant 5.000000e-01 : f32
    %6 = vector.broadcast %cst_5 : f32 to vector<8x128xf32>
    %7 = arith.mulf %6, %5 : vector<8x128xf32>
    %cst_6 = arith.constant 0.707106769 : f32
    %8 = vector.broadcast %cst_6 : f32 to vector<8x128xf32>
    %9 = arith.mulf %5, %8 : vector<8x128xf32>
    %10 = math.erf %9 : vector<8x128xf32>
    %cst_7 = arith.constant 1.000000e+00 : f32
    %11 = vector.broadcast %cst_7 : f32 to vector<8x128xf32>
    %12 = arith.addf %11, %10 : vector<8x128xf32>
    %13 = arith.mulf %7, %12 : vector<8x128xf32>
    %c0_8 = arith.constant 0 : index
    %c0_9 = arith.constant 0 : index
    %14 = vector.load %arg4[%c0_8, %c0_9] : memref<128x128xf32, #tpu.memory_space<vmem>>, vector<128x128xf32>
    %c0_10 = arith.constant 0 : index
    %c0_11 = arith.constant 0 : index
    %15 = vector.load %arg5[%c0_10, %c0_11] : memref<1x128xf32, #tpu.memory_space<vmem>>, vector<1x128xf32>
    %cst_12 = arith.constant dense<0.000000e+00> : vector<8x128xf32>
    %16 = tpu.matmul %13, %14, %cst_12 {dimension_numbers = #tpu.dot_dimension_numbers<[1], [0], [0], [1], [0, 0, 1, 1], [], []>} : vector<8x128xf32>, vector<128x128xf32>, vector<8x128xf32> -> vector<8x128xf32>
    %17 = vector.broadcast %15 : vector<1x128xf32> to vector<8x128xf32>
    %18 = arith.addf %16, %17 : vector<8x128xf32>
    %cst_13 = arith.constant 5.000000e-01 : f32
    %19 = vector.broadcast %cst_13 : f32 to vector<8x128xf32>
    %20 = arith.mulf %19, %18 : vector<8x128xf32>
    %cst_14 = arith.constant 0.707106769 : f32
    %21 = vector.broadcast %cst_14 : f32 to vector<8x128xf32>
    %22 = arith.mulf %18, %21 : vector<8x128xf32>
    %23 = math.erf %22 : vector<8x128xf32>
    %cst_15 = arith.constant 1.000000e+00 : f32
    %24 = vector.broadcast %cst_15 : f32 to vector<8x128xf32>
    %25 = arith.addf %24, %23 : vector<8x128xf32>
    %26 = arith.mulf %20, %25 : vector<8x128xf32>
    %c0_16 = arith.constant 0 : index
    %c0_17 = arith.constant 0 : index
    %27 = vector.load %arg6[%c0_16, %c0_17] : memref<128x128xf32, #tpu.memory_space<vmem>>, vector<128x128xf32>
    %c0_18 = arith.constant 0 : index
    %c0_19 = arith.constant 0 : index
    %28 = vector.load %arg7[%c0_18, %c0_19] : memref<1x128xf32, #tpu.memory_space<vmem>>, vector<1x128xf32>
    %cst_20 = arith.constant dense<0.000000e+00> : vector<8x128xf32>
    %29 = tpu.matmul %26, %27, %cst_20 {dimension_numbers = #tpu.dot_dimension_numbers<[1], [0], [0], [1], [0, 0, 1, 1], [], []>} : vector<8x128xf32>, vector<128x128xf32>, vector<8x128xf32> -> vector<8x128xf32>
    %30 = vector.broadcast %28 : vector<1x128xf32> to vector<8x128xf32>
    %31 = arith.addf %29, %30 : vector<8x128xf32>
    %c0_21 = arith.constant 0 : index
    %c0_22 = arith.constant 0 : index
    %32 = vector.load %arg8[%c0_21, %c0_22] : memref<8x128xf32, #tpu.memory_space<vmem>>, vector<8x128xf32>
    tpu.vector_store %arg8[%c0_21, %c0_22], %31 {strides = array<i32>} : memref<8x128xf32, #tpu.memory_space<vmem>>, vector<8x128xf32>,
    return
  }
  func.func @transform_0(%arg0: i32) -> (i32, i32) {
    %c0_i32 = arith.constant 0 : i32
    %c0_i32_0 = arith.constant 0 : i32
    return %arg0, %c0_i32 : i32, i32
  }
  func.func @transform_1(%arg0: i32) -> (i32, i32) {
    %c0_i32 = arith.constant 0 : i32
    %c0_i32_0 = arith.constant 0 : i32
    %c0_i32_1 = arith.constant 0 : i32
    return %c0_i32, %c0_i32_0 : i32, i32
  }
  func.func @transform_2(%arg0: i32) -> (i32, i32) {
    %c0_i32 = arith.constant 0 : i32
    %c0_i32_0 = arith.constant 0 : i32
    %c0_i32_1 = arith.constant 0 : i32
    return %c0_i32, %c0_i32_0 : i32, i32
  }
  func.func @transform_3(%arg0: i32) -> (i32, i32) {
    %c0_i32 = arith.constant 0 : i32
    %c0_i32_0 = arith.constant 0 : i32
    %c0_i32_1 = arith.constant 0 : i32
    return %c0_i32, %c0_i32_0 : i32, i32
  }
  func.func @transform_4(%arg0: i32) -> (i32, i32) {
    %c0_i32 = arith.constant 0 : i32
    %c0_i32_0 = arith.constant 0 : i32
    %c0_i32_1 = arith.constant 0 : i32
    return %c0_i32, %c0_i32_0 : i32, i32
  }
  func.func @transform_5(%arg0: i32) -> (i32, i32) {
    %c0_i32 = arith.constant 0 : i32
    %c0_i32_0 = arith.constant 0 : i32
    %c0_i32_1 = arith.constant 0 : i32
    return %c0_i32, %c0_i32_0 : i32, i32
  }
  func.func @transform_6(%arg0: i32) -> (i32, i32) {
    %c0_i32 = arith.constant 0 : i32
    %c0_i32_0 = arith.constant 0 : i32
    %c0_i32_1 = arith.constant 0 : i32
    return %c0_i32, %c0_i32_0 : i32, i32
  }
  func.func @transform_7(%arg0: i32) -> (i32, i32) {
    %c0_i32 = arith.constant 0 : i32
    %c0_i32_0 = arith.constant 0 : i32
    return %arg0, %c0_i32 : i32, i32
  }
}

</mosaic_0001>

<llo_original>
// kernel: tpu_custom_call.1
$region0: #{tpu_custom_call.1}
  #allocation0 [shape = 'u32[]', space=smem, size = 0x4, offset = 0x4, fixed_abs, tag = 'smem constant byte address 0x4 - core index']
  #allocation1 [shape = 'u32[144,128]{1,0:T(1,128)}', space=vmem, size = 0x12000, scoped, tag = 'internal scratch']
  %s0 = inlined_call_operand.hbm [shape: f32[8,128], index: 0, kind: input, shape index: {}]
  %s1 = inlined_call_operand.hbm [shape: f32[128,128], index: 1, kind: input, shape index: {}]
  %s2 = inlined_call_operand.vmem [shape: f32[1,128], index: 2, kind: input, shape index: {}]
  %s3 = inlined_call_operand.hbm [shape: f32[128,128], index: 3, kind: input, shape index: {}]
  %s4 = inlined_call_operand.vmem [shape: f32[1,128], index: 4, kind: input, shape index: {}]
  %s5 = inlined_call_operand.hbm [shape: f32[128,128], index: 5, kind: input, shape index: {}]
  %s6 = inlined_call_operand.vmem [shape: f32[1,128], index: 6, kind: input, shape index: {}]
  %s7 = inlined_call_operand.hbm [shape: f32[8,128], index: 7, kind: output, shape index: {}]
  %s8 = sld [smem:[#allocation0]]
  $region54: #{tpu_custom_call.1} parent=0
    _
  %s10 = ssub.s32 1, %s8
  %s11 = scalar_select 0, %s10, %s8
  $region1: #{tpu_custom_call.1} parent=0
    #allocation2 [shape = 'u8[4096]{0}', space=vmem, size = 0x1000, scoped, tag = 'input window, operand 0, single buffered']
    #allocation3 [shape = 's32[1]{0}', space=sflag, size = 0x4, scoped, tag = 'scoped memory for tpu_custom_call.1']
    #allocation4 [shape = 's32[1]{0}', space=sflag, size = 0x4, scoped, tag = 'scoped memory for tpu_custom_call.1']
    #allocation5 [shape = 'u8[65536]{0}', space=vmem, size = 0x10000, scoped, tag = 'input window, operand 1, single buffered']
    #allocation6 [shape = 's32[1]{0}', space=sflag, size = 0x4, scoped, tag = 'scoped memory for tpu_custom_call.1']
    #allocation7 [shape = 'u8[65536]{0}', space=vmem, size = 0x10000, scoped, tag = 'input window, operand 3, single buffered']
    #allocation8 [shape = 'u8[65536]{0}', space=vmem, size = 0x10000, scoped, tag = 'input window, operand 5, single buffered']
    #allocation9 [shape = 's32[1]{0}', space=sflag, size = 0x4, scoped, tag = 'scoped memory for tpu_custom_call.1']
    #allocation10 [shape = 'u8[4096]{0}', space=vmem, size = 0x1000, scoped, tag = 'output window, operand 0, single buffered']
    %12 = vsyncpa [#allocation3], 0
    %13 = vsyncpa [#allocation6], 0
    %14 = vsyncpa [#allocation9], 0
    %15 = vsyncpa [#allocation4], 0
    // Predicated region
    $region2: #{tpu_custom_call.1} parent=1 // pred_check
      _
    $region3: #{tpu_custom_call.1} parent=1 // pred_check_branch
      %17 = sbr.rel (0) target = $region5
    $region4: #{tpu_custom_call.1} parent=1 // pred_region
      %s19 = ssub.s32 128, 128
      %20 = vsyncadd [#allocation3], %s19
      %s22 = sshll.u32 [#allocation2], 4
      %s23 = int_to_ptr.vmem [resolvable:$true] %s22
      %25 = dma.hbm_to_vmem [thread:$0]  %s0, 128, %s23, [#allocation3]
    $region5: #{tpu_custom_call.1} parent=1 // pred_fallthru
      _
    // Predicated region
    $region6: #{tpu_custom_call.1} parent=1 // pred_check
      _
    $region7: #{tpu_custom_call.1} parent=1 // pred_check_branch
      %27 = sbr.rel (0) target = $region9
    $region8: #{tpu_custom_call.1} parent=1 // pred_region
      %s29 = ssub.s32 2048, 2048
      %30 = vsyncadd [#allocation6], %s29
      %s31 = sshll.u32 [#allocation5], 4
      %s32 = int_to_ptr.vmem [resolvable:$true] %s31
      %37 = dma.hbm_to_vmem [thread:$0]  %s1, 2048, %s32, [#allocation6], 128, 128, 8
    $region9: #{tpu_custom_call.1} parent=1 // pred_fallthru
      _
    // Predicated region
    $region10: #{tpu_custom_call.1} parent=1 // pred_check
      _
    $region11: #{tpu_custom_call.1} parent=1 // pred_check_branch
      %39 = sbr.rel (0) target = $region13
    $region12: #{tpu_custom_call.1} parent=1 // pred_region
      _
    $region13: #{tpu_custom_call.1} parent=1 // pred_fallthru
      _
    // Predicated region
    $region14: #{tpu_custom_call.1} parent=1 // pred_check
      _
    $region15: #{tpu_custom_call.1} parent=1 // pred_check_branch
      %41 = sbr.rel (0) target = $region17
    $region16: #{tpu_custom_call.1} parent=1 // pred_region
      %s43 = ssub.s32 2048, 2048
      %44 = vsyncadd [#allocation6], %s43
      %s45 = sshll.u32 [#allocation7], 4
      %s46 = int_to_ptr.vmem [resolvable:$true] %s45
      %51 = dma.hbm_to_vmem [thread:$0]  %s3, 2048, %s46, [#allocation6], 128, 128, 8
    $region17: #{tpu_custom_call.1} parent=1 // pred_fallthru
      _
    // Predicated region
    $region18: #{tpu_custom_call.1} parent=1 // pred_check
      _
    $region19: #{tpu_custom_call.1} parent=1 // pred_check_branch
      %53 = sbr.rel (0) target = $region21
    $region20: #{tpu_custom_call.1} parent=1 // pred_region
      _
    $region21: #{tpu_custom_call.1} parent=1 // pred_fallthru
      _
    // Predicated region
    $region22: #{tpu_custom_call.1} parent=1 // pred_check
      _
    $region23: #{tpu_custom_call.1} parent=1 // pred_check_branch
      %55 = sbr.rel (0) target = $region25
    $region24: #{tpu_custom_call.1} parent=1 // pred_region
      %s57 = ssub.s32 2048, 2048
      %58 = vsyncadd [#allocation9], %s57
      %s59 = sshll.u32 [#allocation8], 4
      %s60 = int_to_ptr.vmem [resolvable:$true] %s59
      %65 = dma.hbm_to_vmem [thread:$0]  %s5, 2048, %s60, [#allocation9], 128, 128, 8
    $region25: #{tpu_custom_call.1} parent=1 // pred_fallthru
      _
    // Predicated region
    $region26: #{tpu_custom_call.1} parent=1 // pred_check
      _
    $region27: #{tpu_custom_call.1} parent=1 // pred_check_branch
      %67 = sbr.rel (0) target = $region29
    $region28: #{tpu_custom_call.1} parent=1 // pred_region
      _
    $region29: #{tpu_custom_call.1} parent=1 // pred_fallthru
      _
    // Predicated region
    $region30: #{tpu_custom_call.1} parent=1 // pred_check
      _
    $region31: #{tpu_custom_call.1} parent=1 // pred_check_branch
      %69 = sbr.rel (0) target = $region33
    $region32: #{tpu_custom_call.1} parent=1 // pred_region
      %70 = dma.done [#allocation3], 128
    $region33: #{tpu_custom_call.1} parent=1 // pred_fallthru
      _
    // Predicated region
    $region34: #{tpu_custom_call.1} parent=1 // pred_check
      _
    $region35: #{tpu_custom_call.1} parent=1 // pred_check_branch
      %72 = sbr.rel (0) target = $region37
    $region36: #{tpu_custom_call.1} parent=1 // pred_region
      %73 = dma.done [#allocation6], 2048
    $region37: #{tpu_custom_call.1} parent=1 // pred_fallthru
      _
    // Predicated region
    $region38: #{tpu_custom_call.1} parent=1 // pred_check
      _
    $region39: #{tpu_custom_call.1} parent=1 // pred_check_branch
      %75 = sbr.rel (0) target = $region41
    $region40: #{tpu_custom_call.1} parent=1 // pred_region
      %76 = dma.done [#allocation6], 2048
    $region41: #{tpu_custom_call.1} parent=1 // pred_fallthru
      _
    // Predicated region
    $region42: #{tpu_custom_call.1} parent=1 // pred_check
      _
    $region43: #{tpu_custom_call.1} parent=1 // pred_check_branch
      %78 = sbr.rel (0) target = $region45
    $region44: #{tpu_custom_call.1} parent=1 // pred_region
      %79 = dma.done [#allocation9], 2048
    $region45: #{tpu_custom_call.1} parent=1 // pred_fallthru
      _
    %v80 = vld [vmem:[#allocation2] sm:$0xff]
    %v81 = vld [vmem:[#allocation5] sm:$0xff]
    %v82 = vld [vmem:[#allocation5 + $0x8] sm:$0xff]
    %v83 = vld [vmem:[#allocation5 + $0x10] sm:$0xff]
    %v84 = vld [vmem:[#allocation5 + $0x18] sm:$0xff]
    %v85 = vld [vmem:[#allocation5 + $0x20] sm:$0xff]
    %v86 = vld [vmem:[#allocation5 + $0x28] sm:$0xff]
    %v87 = vld [vmem:[#allocation5 + $0x30] sm:$0xff]
    %v88 = vld [vmem:[#allocation5 + $0x38] sm:$0xff]
    %v89 = vld [vmem:[#allocation5 + $0x40] sm:$0xff]
    %v90 = vld [vmem:[#allocation5 + $0x48] sm:$0xff]
    %v91 = vld [vmem:[#allocation5 + $0x50] sm:$0xff]
    %v92 = vld [vmem:[#allocation5 + $0x58] sm:$0xff]
    %v93 = vld [vmem:[#allocation5 + $0x60] sm:$0xff]
    %v94 = vld [vmem:[#allocation5 + $0x68] sm:$0xff]
    %v95 = vld [vmem:[#allocation5 + $0x70] sm:$0xff]
    %v96 = vld [vmem:[#allocation5 + $0x78] sm:$0xff]
    %v97 = vld [vmem:[%s2] sm:$0x1]
    %v99 = vlaneseq
    %v100 = vshrl.u32 %v99, 7
    %v101 = vsub.s32 0, %v100
    %v102 = vrot.slane %v97, %v101
    %104 = vmatprep.subr.mxu0 0.0
    %105 = vmatpush1.msra.mxu0 %v81
    %106 = vmatprep.subr.mxu0 0.0
    %107 = vmatpush1.msra.mxu0 %v82
    %108 = vmatprep.subr.mxu0 0.0
    %109 = vmatpush1.msra.mxu0 %v83
    %110 = vmatprep.subr.mxu0 0.0
    %111 = vmatpush1.msra.mxu0 %v84
    %112 = vmatprep.subr.mxu0 0.0
    %113 = vmatpush1.msra.mxu0 %v85
    %114 = vmatprep.subr.mxu0 0.0
    %115 = vmatpush1.msra.mxu0 %v86
    %116 = vmatprep.subr.mxu0 0.0
    %117 = vmatpush1.msra.mxu0 %v87
    %118 = vmatprep.subr.mxu0 0.0
    %119 = vmatpush1.msra.mxu0 %v88
    %120 = vmatprep.subr.mxu0 0.0
    %121 = vmatpush1.msra.mxu0 %v89
    %122 = vmatprep.subr.mxu0 0.0
    %123 = vmatpush1.msra.mxu0 %v90
    %124 = vmatprep.subr.mxu0 0.0
    %125 = vmatpush1.msra.mxu0 %v91
    %126 = vmatprep.subr.mxu0 0.0
    %127 = vmatpush1.msra.mxu0 %v92
    %128 = vmatprep.subr.mxu0 0.0
    %129 = vmatpush1.msra.mxu0 %v93
    %130 = vmatprep.subr.mxu0 0.0
    %131 = vmatpush1.msra.mxu0 %v94
    %132 = vmatprep.subr.mxu0 0.0
    %133 = vmatpush1.msra.mxu0 %v95
    %134 = vmatprep.subr.mxu0 0.0
    %135 = vmatpush1.msra.mxu0 %v96
    %136 = vmatprep.subr.mxu0 0.0
    %137 = vmatpush1.msra.mxu0 0.0
    %138 = vmatprep.subr.mxu0 0.0
    %139 = vmatpush1.msra.mxu0 0.0
    %140 = vmatprep.subr.mxu0 0.0
    %141 = vmatpush1.msra.mxu0 0.0
    %142 = vmatprep.subr.mxu0 0.0
    %143 = vmatpush1.msra.mxu0 0.0
    %144 = vmatprep.subr.mxu0 0.0
    %145 = vmatpush1.msra.mxu0 0.0
    %146 = vmatprep.subr.mxu0 0.0
    %147 = vmatpush1.msra.mxu0 0.0
    %148 = vmatprep.subr.mxu0 0.0
    %149 = vmatpush1.msra.mxu0 0.0
    %150 = vmatprep.subr.mxu0 0.0
    %151 = vmatpush1.msra.mxu0 0.0
    %152 = vmatprep.subr.mxu0 0.0
    %153 = vmatpush1.msra.mxu0 0.0
    %154 = vmatprep.subr.mxu0 0.0
    %155 = vmatpush1.msra.mxu0 0.0
    %156 = vmatprep.subr.mxu0 0.0
    %157 = vmatpush1.msra.mxu0 0.0
    %158 = vmatprep.subr.mxu0 0.0
    %159 = vmatpush1.msra.mxu0 0.0
    %160 = vmatprep.subr.mxu0 0.0
    %161 = vmatpush1.msra.mxu0 0.0
    %162 = vmatprep.subr.mxu0 0.0
    %163 = vmatpush1.msra.mxu0 0.0
    %164 = vmatprep.subr.mxu0 0.0
    %165 = vmatpush1.msra.mxu0 0.0
    %166 = vmatprep.subr.mxu0 0.0
    %167 = vmatpush1.msra.mxu0 0.0
    %168 = vmatprep.mubr.f32.mxu0 0.0
    %169 = vmatmul.mubr.f32.gmra.mrb[0].mxu0 %v80
    %v170 = vpop.f32.mrb[0].mxu0
    %v171 = vadd.f32 %v102, %v170
    %v172 = vpop.f32.mrb[0].mxu0
    %173 = vdwg.mxu0
    %v174 = vmul.f32 %v171, 0.5
    %v175 = vmul.f32 %v171, 0.70710677
    %v176 = verf.f32.pop %v175
    %v177 = vadd.f32 %v176, 1.0
    %v178 = vmul.f32 %v174, %v177
    %v179 = vld [vmem:[#allocation7] sm:$0xff]
    %v180 = vld [vmem:[#allocation7 + $0x8] sm:$0xff]
    %v181 = vld [vmem:[#allocation7 + $0x10] sm:$0xff]
    %v182 = vld [vmem:[#allocation7 + $0x18] sm:$0xff]
    %v183 = vld [vmem:[#allocation7 + $0x20] sm:$0xff]
    %v184 = vld [vmem:[#allocation7 + $0x28] sm:$0xff]
    %v185 = vld [vmem:[#allocation7 + $0x30] sm:$0xff]
    %v186 = vld [vmem:[#allocation7 + $0x38] sm:$0xff]
    %v187 = vld [vmem:[#allocation7 + $0x40] sm:$0xff]
    %v188 = vld [vmem:[#allocation7 + $0x48] sm:$0xff]
    %v189 = vld [vmem:[#allocation7 + $0x50] sm:$0xff]
    %v190 = vld [vmem:[#allocation7 + $0x58] sm:$0xff]
    %v191 = vld [vmem:[#allocation7 + $0x60] sm:$0xff]
    %v192 = vld [vmem:[#allocation7 + $0x68] sm:$0xff]
    %v193 = vld [vmem:[#allocation7 + $0x70] sm:$0xff]
    %v194 = vld [vmem:[#allocation7 + $0x78] sm:$0xff]
    %v195 = vld [vmem:[%s4] sm:$0x1]
    %v197 = vlaneseq
    %v198 = vshrl.u32 %v197, 7
    %v199 = vsub.s32 0, %v198
    %v200 = vrot.slane %v195, %v199
    %202 = vmatprep.subr.mxu0 0.0
    %203 = vmatpush1.msra.mxu0 %v179
    %204 = vmatprep.subr.mxu0 0.0
    %205 = vmatpush1.msra.mxu0 %v180
    %206 = vmatprep.subr.mxu0 0.0
    %207 = vmatpush1.msra.mxu0 %v181
    %208 = vmatprep.subr.mxu0 0.0
    %209 = vmatpush1.msra.mxu0 %v182
    %210 = vmatprep.subr.mxu0 0.0
    %211 = vmatpush1.msra.mxu0 %v183
    %212 = vmatprep.subr.mxu0 0.0
    %213 = vmatpush1.msra.mxu0 %v184
    %214 = vmatprep.subr.mxu0 0.0
    %215 = vmatpush1.msra.mxu0 %v185
    %216 = vmatprep.subr.mxu0 0.0
    %217 = vmatpush1.msra.mxu0 %v186
    %218 = vmatprep.subr.mxu0 0.0
    %219 = vmatpush1.msra.mxu0 %v187
    %220 = vmatprep.subr.mxu0 0.0
    %221 = vmatpush1.msra.mxu0 %v188
    %222 = vmatprep.subr.mxu0 0.0
    %223 = vmatpush1.msra.mxu0 %v189
    %224 = vmatprep.subr.mxu0 0.0
    %225 = vmatpush1.msra.mxu0 %v190
    %226 = vmatprep.subr.mxu0 0.0
    %227 = vmatpush1.msra.mxu0 %v191
    %228 = vmatprep.subr.mxu0 0.0
    %229 = vmatpush1.msra.mxu0 %v192
    %230 = vmatprep.subr.mxu0 0.0
    %231 = vmatpush1.msra.mxu0 %v193
    %232 = vmatprep.subr.mxu0 0.0
    %233 = vmatpush1.msra.mxu0 %v194
    %234 = vmatprep.subr.mxu0 0.0
    %235 = vmatpush1.msra.mxu0 0.0
    %236 = vmatprep.subr.mxu0 0.0
    %237 = vmatpush1.msra.mxu0 0.0
    %238 = vmatprep.subr.mxu0 0.0
    %239 = vmatpush1.msra.mxu0 0.0
    %240 = vmatprep.subr.mxu0 0.0
    %241 = vmatpush1.msra.mxu0 0.0
    %242 = vmatprep.subr.mxu0 0.0
    %243 = vmatpush1.msra.mxu0 0.0
    %244 = vmatprep.subr.mxu0 0.0
    %245 = vmatpush1.msra.mxu0 0.0
    %246 = vmatprep.subr.mxu0 0.0
    %247 = vmatpush1.msra.mxu0 0.0
    %248 = vmatprep.subr.mxu0 0.0
    %249 = vmatpush1.msra.mxu0 0.0
    %250 = vmatprep.subr.mxu0 0.0
    %251 = vmatpush1.msra.mxu0 0.0
    %252 = vmatprep.subr.mxu0 0.0
    %253 = vmatpush1.msra.mxu0 0.0
    %254 = vmatprep.subr.mxu0 0.0
    %255 = vmatpush1.msra.mxu0 0.0
    %256 = vmatprep.subr.mxu0 0.0
    %257 = vmatpush1.msra.mxu0 0.0
    %258 = vmatprep.subr.mxu0 0.0
    %259 = vmatpush1.msra.mxu0 0.0
    %260 = vmatprep.subr.mxu0 0.0
    %261 = vmatpush1.msra.mxu0 0.0
    %262 = vmatprep.subr.mxu0 0.0
    %263 = vmatpush1.msra.mxu0 0.0
    %264 = vmatprep.subr.mxu0 0.0
    %265 = vmatpush1.msra.mxu0 0.0
    %266 = vmatprep.mubr.f32.mxu0 0.0
    %267 = vmatmul.mubr.f32.gmra.mrb[0].mxu0 %v178
    %v268 = vpop.f32.mrb[0].mxu0
    %v269 = vadd.f32 %v200, %v268
    %v270 = vpop.f32.mrb[0].mxu0
    %271 = vdwg.mxu0
    %v272 = vmul.f32 %v269, 0.5
    %v273 = vmul.f32 %v269, 0.70710677
    %v274 = verf.f32.pop %v273
    %v275 = vadd.f32 %v274, 1.0
    %v276 = vmul.f32 %v272, %v275
    %v277 = vld [vmem:[#allocation8] sm:$0xff]
    %v278 = vld [vmem:[#allocation8 + $0x8] sm:$0xff]
    %v279 = vld [vmem:[#allocation8 + $0x10] sm:$0xff]
    %v280 = vld [vmem:[#allocation8 + $0x18] sm:$0xff]
    %v281 = vld [vmem:[#allocation8 + $0x20] sm:$0xff]
    %v282 = vld [vmem:[#allocation8 + $0x28] sm:$0xff]
    %v283 = vld [vmem:[#allocation8 + $0x30] sm:$0xff]
    %v284 = vld [vmem:[#allocation8 + $0x38] sm:$0xff]
    %v285 = vld [vmem:[#allocation8 + $0x40] sm:$0xff]
    %v286 = vld [vmem:[#allocation8 + $0x48] sm:$0xff]
    %v287 = vld [vmem:[#allocation8 + $0x50] sm:$0xff]
    %v288 = vld [vmem:[#allocation8 + $0x58] sm:$0xff]
    %v289 = vld [vmem:[#allocation8 + $0x60] sm:$0xff]
    %v290 = vld [vmem:[#allocation8 + $0x68] sm:$0xff]
    %v291 = vld [vmem:[#allocation8 + $0x70] sm:$0xff]
    %v292 = vld [vmem:[#allocation8 + $0x78] sm:$0xff]
    %v293 = vld [vmem:[%s6] sm:$0x1]
    %v295 = vlaneseq
    %v296 = vshrl.u32 %v295, 7
    %v297 = vsub.s32 0, %v296
    %v298 = vrot.slane %v293, %v297
    %300 = vmatprep.subr.mxu0 0.0
    %301 = vmatpush1.msra.mxu0 %v277
    %302 = vmatprep.subr.mxu0 0.0
    %303 = vmatpush1.msra.mxu0 %v278
    %304 = vmatprep.subr.mxu0 0.0
    %305 = vmatpush1.msra.mxu0 %v279
    %306 = vmatprep.subr.mxu0 0.0
    %307 = vmatpush1.msra.mxu0 %v280
    %308 = vmatprep.subr.mxu0 0.0
    %309 = vmatpush1.msra.mxu0 %v281
    %310 = vmatprep.subr.mxu0 0.0
    %311 = vmatpush1.msra.mxu0 %v282
    %312 = vmatprep.subr.mxu0 0.0
    %313 = vmatpush1.msra.mxu0 %v283
    %314 = vmatprep.subr.mxu0 0.0
    %315 = vmatpush1.msra.mxu0 %v284
    %316 = vmatprep.subr.mxu0 0.0
    %317 = vmatpush1.msra.mxu0 %v285
    %318 = vmatprep.subr.mxu0 0.0
    %319 = vmatpush1.msra.mxu0 %v286
    %320 = vmatprep.subr.mxu0 0.0
    %321 = vmatpush1.msra.mxu0 %v287
    %322 = vmatprep.subr.mxu0 0.0
    %323 = vmatpush1.msra.mxu0 %v288
    %324 = vmatprep.subr.mxu0 0.0
    %325 = vmatpush1.msra.mxu0 %v289
    %326 = vmatprep.subr.mxu0 0.0
    %327 = vmatpush1.msra.mxu0 %v290
    %328 = vmatprep.subr.mxu0 0.0
    %329 = vmatpush1.msra.mxu0 %v291
    %330 = vmatprep.subr.mxu0 0.0
    %331 = vmatpush1.msra.mxu0 %v292
    %332 = vmatprep.subr.mxu0 0.0
    %333 = vmatpush1.msra.mxu0 0.0
    %334 = vmatprep.subr.mxu0 0.0
    %335 = vmatpush1.msra.mxu0 0.0
    %336 = vmatprep.subr.mxu0 0.0
    %337 = vmatpush1.msra.mxu0 0.0
    %338 = vmatprep.subr.mxu0 0.0
    %339 = vmatpush1.msra.mxu0 0.0
    %340 = vmatprep.subr.mxu0 0.0
    %341 = vmatpush1.msra.mxu0 0.0
    %342 = vmatprep.subr.mxu0 0.0
    %343 = vmatpush1.msra.mxu0 0.0
    %344 = vmatprep.subr.mxu0 0.0
    %345 = vmatpush1.msra.mxu0 0.0
    %346 = vmatprep.subr.mxu0 0.0
    %347 = vmatpush1.msra.mxu0 0.0
    %348 = vmatprep.subr.mxu0 0.0
    %349 = vmatpush1.msra.mxu0 0.0
    %350 = vmatprep.subr.mxu0 0.0
    %351 = vmatpush1.msra.mxu0 0.0
    %352 = vmatprep.subr.mxu0 0.0
    %353 = vmatpush1.msra.mxu0 0.0
    %354 = vmatprep.subr.mxu0 0.0
    %355 = vmatpush1.msra.mxu0 0.0
    %356 = vmatprep.subr.mxu0 0.0
    %357 = vmatpush1.msra.mxu0 0.0
    %358 = vmatprep.subr.mxu0 0.0
    %359 = vmatpush1.msra.mxu0 0.0
    %360 = vmatprep.subr.mxu0 0.0
    %361 = vmatpush1.msra.mxu0 0.0
    %362 = vmatprep.subr.mxu0 0.0
    %363 = vmatpush1.msra.mxu0 0.0
    %364 = vmatprep.mubr.f32.mxu0 0.0
    %365 = vmatmul.mubr.f32.gmra.mrb[0].mxu0 %v276
    %v366 = vpop.f32.mrb[0].mxu0
    %v367 = vadd.f32 %v298, %v366
    %v368 = vpop.f32.mrb[0].mxu0
    %369 = vdwg.mxu0
    %370 = vst [vmem:[#allocation10] sm:$0xff] %v367
    // Predicated region
    $region46: #{tpu_custom_call.1} parent=1 // pred_check
      _
    $region47: #{tpu_custom_call.1} parent=1 // pred_check_branch
      %372 = sbr.rel (0) target = $region49
    $region48: #{tpu_custom_call.1} parent=1 // pred_region
      %s374 = ssub.s32 128, 128
      %375 = vsyncadd [#allocation4], %s374
      %s377 = sshll.u32 [#allocation10], 4
      %s378 = int_to_ptr.vmem [resolvable:$true] %s377
      %380 = dma.vmem_to_hbm [thread:$0]  %s378, 128, %s7, [#allocation4]
    $region49: #{tpu_custom_call.1} parent=1 // pred_fallthru
      _
    // Predicated region
    $region50: #{tpu_custom_call.1} parent=1 // pred_check
      _
    $region51: #{tpu_custom_call.1} parent=1 // pred_check_branch
      %382 = sbr.rel (0) target = $region53
    $region52: #{tpu_custom_call.1} parent=1 // pred_region
      %383 = dma.done [#allocation4], 128
    $region53: #{tpu_custom_call.1} parent=1 // pred_fallthru
      _
    %384 = vsyncpa [#allocation3], 1
    %385 = vsyncpa [#allocation6], 1
    %386 = vsyncpa [#allocation9], 1
    %387 = vsyncpa [#allocation4], 1

</llo_original>
